<compile_context>
chip_gen: v5e
topology: v5e:2x2
jax: 0.10.0
libtpu: 0.0.40
codegen_flags: <defaults>
</compile_context>

<pallas_src>
import functools

import jax
import jax.numpy as jnp
from jax.experimental import pallas as pl
from jax.experimental.pallas import tpu as pltpu


def _round_up(x, m):
    return (x + m - 1) // m * m


def _make_mlp_kernel(n_layers, compute_dtype):
    """MLP chain on transposed activations: h lives as [features, batch_tile]."""

    def kernel(x_ref, *refs):
        # refs = (W_0..W_{L-1}, b_0..b_{L-1}, out)
        w_refs = refs[:n_layers]
        b_refs = refs[n_layers:2 * n_layers]
        o_ref = refs[2 * n_layers]

        # Layer 0: time feature is already folded into the 8-row x tile and W0
        # is zero-padded to K=8 -> one clean MXU matmul.
        h = jnp.dot(w_refs[0][...], x_ref[...],
                    preferred_element_type=jnp.float32)          # [H, TB] f32
        h = jnp.maximum(h + b_refs[0][...], 0.0)

        # Hidden layers + final projection.  Weights were pre-cast in the
        # wrapper; only the f32 accumulator is re-cast before each MXU push
        # (a no-op when compute_dtype == float32).
        # NOTE: with H=32 these matmuls are MXU-pass-bound; if tuning further,
        # A/B the dot orientation via a bundle dump, keeping the final
        # [C, TB] store lane-dense either way.
        for li in range(1, n_layers):
            h = jnp.dot(w_refs[li][...], h.astype(compute_dtype),
                        preferred_element_type=jnp.float32)
            h = h + b_refs[li][...]
            if li < n_layers - 1:
                h = jnp.maximum(h, 0.0)

        o_ref[...] = h.astype(o_ref.dtype)                       # lane-dense [C, TB]

    return kernel


@functools.partial(jax.jit, static_argnames=("compute_dtype", "block_b"))
def ddpm_forward(inputs, times, weights, biases, *,
                 compute_dtype=jnp.float32, block_b=4096):
    """Pallas equivalent of DDPM.forward(inputs, times).

    Args:
      inputs:  [B, C] float32 perturbed samples.
      times:   [B]    time steps (any real dtype).
      weights: tuple of [out, in] float32 matrices (PyTorch layout,
               len = n_hidden + 2); weights[0] is [H, C+1].
      biases:  tuple of [out, 1] float32 column vectors.
      compute_dtype: MXU input dtype (float32 or bfloat16); accumulation is
               always float32.
      block_b: max batch (lane) tile size; sweep 2048-8192 for huge batches.

    Returns:
      [B, C] float32 predicted perturbation noise.
    """
    batch, n_channels = inputs.shape
    n_layers = len(weights)
    n_out = weights[-1].shape[0]
    k_in = n_channels + 1                       # features after cat with time
    k0 = max(8, _round_up(k_in, 8))             # pad layer-0 K to sublane min

    # ---- Batch tiling: lane-dense tiles, even grid whenever possible --------
    block_b = _round_up(block_b, 128)
    b_pad = _round_up(batch, 128)
    n_tiles = max(pl.cdiv(b_pad, block_b), 2 if b_pad >= 256 else 1)
    tb = _round_up(pl.cdiv(b_pad, n_tiles), 128)
    b_pad = _round_up(b_pad, tb)
    grid = (b_pad // tb,)

    # ---- Single augmented, transposed, padded, pre-cast input slab ----------
    # rows = [inputs.T (C) ; times (1) ; zeros (k0 - C - 1)], batch on lanes.
    x_aug = jnp.zeros((k0, b_pad), compute_dtype)
    x_aug = x_aug.at[:n_channels, :batch].set(inputs.T.astype(compute_dtype))
    x_aug = x_aug.at[n_channels, :batch].set(times.astype(compute_dtype))

    # ---- Pre-cast / pre-pad parameters (VMEM-resident across grid steps) ----
    w0 = jnp.zeros((weights[0].shape[0], k0), compute_dtype)
    w0 = w0.at[:, :k_in].set(weights[0].astype(compute_dtype))
    ws = (w0,) + tuple(w.astype(compute_dtype) for w in weights[1:])
    bs = tuple(b.astype(jnp.float32) for b in biases)   # added to f32 accum

    def streamed(rows):
        return pl.BlockSpec((rows, tb), lambda i: (0, i))

    def resident(shape):
        return pl.BlockSpec(shape, lambda i: (0, 0))

    in_specs = ([streamed(k0)]
                + [resident(w.shape) for w in ws]
                + [resident(b.shape) for b in bs])
    out_spec = streamed(n_out)

    kernel = _make_mlp_kernel(n_layers, compute_dtype)

    outT = pl.pallas_call(
        kernel,
        out_shape=jax.ShapeDtypeStruct((n_out, b_pad), inputs.dtype),
        grid=grid,
        in_specs=in_specs,
        out_specs=out_spec,
        compiler_params=pltpu.CompilerParams(
            # Independent batch tiles -> shard across TensorCores on v7x.
            dimension_semantics=("parallel",)),
    )(x_aug, *ws, *bs)

    # Drop batch padding, return in the module's [B, C] layout.
    return outT[:, :batch].T


def init_params(key, n_channels, hidden_dim, n_hidden):
    """PyTorch-style Linear init (U(-k, k), k = 1/sqrt(fan_in)), [out, in] layout."""
    dims = [n_channels + 1] + [hidden_dim] * (n_hidden + 1) + [n_channels]
    weights, biases = [], []
    for li in range(len(dims) - 1):
        fan_in, fan_out = dims[li], dims[li + 1]
        k = 1.0 / jnp.sqrt(jnp.float32(fan_in))
        key, wk, bk = jax.random.split(key, 3)
        w = jax.random.uniform(wk, (fan_out, fan_in), jnp.float32, -k, k)
        b = jax.random.uniform(bk, (fan_out, 1), jnp.float32, -k, k)
        weights.append(w)
        biases.append(b)
    return tuple(weights), tuple(biases)


def reference_forward(inputs, times, weights, biases):
    """Pure-JAX reference (concat + dense chain), high-precision f32 dots."""
    h = jnp.concatenate([inputs, times[:, None].astype(inputs.dtype)], axis=1)
    n_layers = len(weights)
    for li in range(n_layers):
        h = jnp.dot(h, weights[li].T,
                    precision=jax.lax.Precision.HIGHEST) + biases[li].T
        if li < n_layers - 1:
            h = jnp.maximum(h, 0.0)
    return h


if __name__ == "__main__":
    # Config consistent with the module:
    #   cfg.model.n_channels = 4, cfg.model.h_dim = 32, cfg.model.n_hidden = 2
    #   cfg.DDPM.n_steps = 16
    batch = 8
    n_channels = 4
    hidden_dim = 32
    n_hidden = 2
    n_steps = 16

    key = jax.random.PRNGKey(0)
    k_in, k_t, k_p, k_big, k_huge = jax.random.split(key, 5)

    inputs = jax.random.normal(k_in, (batch, n_channels), jnp.float32)
    times = jax.random.randint(k_t, (batch,), 0, n_steps).astype(jnp.float32)
    weights, biases = init_params(k_p, n_channels, hidden_dim, n_hidden)

    # Diffusion-schedule buffers (registered buffers in the PyTorch module).
    # Not used by forward(); computed here only for parity with the module.
    betas = jnp.linspace(1e-4, 2e-2, n_steps, dtype=jnp.float32)
    alphas = 1.0 - betas
    alpha_bars = jnp.cumprod(alphas)
    beta_bars = 1.0 - alpha_bars
    _ = dict(sqrt_alpha_bars=jnp.sqrt(alpha_bars),
             sqrt_beta_bars=jnp.sqrt(beta_bars),
             reciprocal_sqrt_alphas=jnp.sqrt(1.0 / alphas),
             denoise_coeff=betas / jnp.sqrt(beta_bars),
             sigma=jnp.sqrt(betas))

    # --- small batch (single 128-lane tile), f32 ------------------------------
    out = jax.block_until_ready(ddpm_forward(inputs, times, weights, biases))
    ref = reference_forward(inputs, times, weights, biases)
    assert out.shape == (batch, n_channels)
    assert out.dtype == jnp.float32
    assert jnp.allclose(out, ref, atol=1e-4, rtol=1e-4), "f32 mismatch vs reference"

    # --- medium batch: even 2-step grid (both TensorCores on v7x) -------------
    big_b = 1000  # pads to 1024 -> 2 tiles of 512
    big_inputs = jax.random.normal(k_big, (big_b, n_channels), jnp.float32)
    big_times = (jnp.arange(big_b, dtype=jnp.float32) % n_steps)
    big_out = jax.block_until_ready(
        ddpm_forward(big_inputs, big_times, weights, biases))
    big_ref = reference_forward(big_inputs, big_times, weights, biases)
    assert big_out.shape == (big_b, n_channels)
    assert jnp.allclose(big_out, big_ref, atol=1e-4, rtol=1e-4), "grid mismatch"

    # --- large batch: multi-step streaming grid with big lane tiles -----------
    huge_b = 10000
    huge_inputs = jax.random.normal(k_huge, (huge_b, n_channels), jnp.float32)
    huge_times = (jnp.arange(huge_b, dtype=jnp.float32) % n_steps)
    huge_out = jax.block_until_ready(
        ddpm_forward(huge_inputs, huge_times, weights, biases))
    huge_ref = reference_forward(huge_inputs, huge_times, weights, biases)
    assert huge_out.shape == (huge_b, n_channels)
    assert jnp.allclose(huge_out, huge_ref, atol=1e-4, rtol=1e-4), "big-tile mismatch"

    # --- bf16 MXU inputs (v6e/v7x native dtype), f32 accumulation -------------
    bf16_out = jax.block_until_ready(
        ddpm_forward(inputs, times, weights, biases, compute_dtype=jnp.bfloat16))
    assert jnp.allclose(bf16_out, ref, atol=1e-1, rtol=1e-1), "bf16 mismatch"

    print("KERNEL_OK")
</pallas_src>

<mosaic_0001>
module attributes {stable_mosaic.version = 11 : i64} {
  func.func @kernel(%arg0: i32, %arg1: memref<8x128xf32, #tpu.memory_space<vmem>>, %arg2: memref<32x8xf32, #tpu.memory_space<vmem>>, %arg3: memref<32x32xf32, #tpu.memory_space<vmem>>, %arg4: memref<32x32xf32, #tpu.memory_space<vmem>>, %arg5: memref<4x32xf32, #tpu.memory_space<vmem>>, %arg6: memref<32x1xf32, #tpu.memory_space<vmem>>, %arg7: memref<32x1xf32, #tpu.memory_space<vmem>>, %arg8: memref<32x1xf32, #tpu.memory_space<vmem>>, %arg9: memref<4x1xf32, #tpu.memory_space<vmem>>, %arg10: memref<4x128xf32, #tpu.memory_space<vmem>>) attributes {dimension_semantics = [#tpu.dimension_semantics<parallel>], iteration_bounds = array<i64: 1>, scalar_prefetch = 0 : i64, scratch_operands = 0 : i64, tpu.core_type = #tpu.core_type<tc>, window_params = [{transform_indices = @transform_0, window_bounds = array<i64: 8, 128>}, {pipeline_mode = #tpu.pipeline_mode<synchronous>, transform_indices = @transform_1, window_bounds = array<i64: 32, 8>}, {pipeline_mode = #tpu.pipeline_mode<synchronous>, transform_indices = @transform_2, window_bounds = array<i64: 32, 32>}, {pipeline_mode = #tpu.pipeline_mode<synchronous>, transform_indices = @transform_3, window_bounds = array<i64: 32, 32>}, {pipeline_mode = #tpu.pipeline_mode<synchronous>, transform_indices = @transform_4, window_bounds = array<i64: 4, 32>}, {pipeline_mode = #tpu.pipeline_mode<synchronous>, transform_indices = @transform_5, window_bounds = array<i64: 32, 1>}, {pipeline_mode = #tpu.pipeline_mode<synchronous>, transform_indices = @transform_6, window_bounds = array<i64: 32, 1>}, {pipeline_mode = #tpu.pipeline_mode<synchronous>, transform_indices = @transform_7, window_bounds = array<i64: 32, 1>}, {pipeline_mode = #tpu.pipeline_mode<synchronous>, transform_indices = @transform_8, window_bounds = array<i64: 4, 1>}, {transform_indices = @transform_9, window_bounds = array<i64: 4, 128>}]} {
    %c0 = arith.constant 0 : index
    %c0_0 = arith.constant 0 : index
    %0 = vector.load %arg2[%c0, %c0_0] : memref<32x8xf32, #tpu.memory_space<vmem>>, vector<32x8xf32>
    %c0_1 = arith.constant 0 : index
    %c0_2 = arith.constant 0 : index
    %1 = vector.load %arg1[%c0_1, %c0_2] : memref<8x128xf32, #tpu.memory_space<vmem>>, vector<8x128xf32>
    %cst = arith.constant dense<0.000000e+00> : vector<32x128xf32>
    %2 = tpu.matmul %0, %1, %cst {dimension_numbers = #tpu.dot_dimension_numbers<[1], [0], [0], [1], [0, 0, 1, 1], [], []>} : vector<32x8xf32>, vector<8x128xf32>, vector<32x128xf32> -> vector<32x128xf32>
    %c0_3 = arith.constant 0 : index
    %c0_4 = arith.constant 0 : index
    %3 = vector.load %arg6[%c0_3, %c0_4] : memref<32x1xf32, #tpu.memory_space<vmem>>, vector<32x1xf32>
    %4 = vector.broadcast %3 : vector<32x1xf32> to vector<32x128xf32>
    %5 = arith.addf %2, %4 : vector<32x128xf32>
    %cst_5 = arith.constant 0.000000e+00 : f32
    %6 = vector.broadcast %cst_5 : f32 to vector<32x128xf32>
    %7 = arith.maximumf %5, %6 : vector<32x128xf32>
    %c0_6 = arith.constant 0 : index
    %c0_7 = arith.constant 0 : index
    %8 = vector.load %arg3[%c0_6, %c0_7] : memref<32x32xf32, #tpu.memory_space<vmem>>, vector<32x32xf32>
    %cst_8 = arith.constant dense<0.000000e+00> : vector<32x128xf32>
    %9 = tpu.matmul %8, %7, %cst_8 {dimension_numbers = #tpu.dot_dimension_numbers<[1], [0], [0], [1], [0, 0, 1, 1], [], []>} : vector<32x32xf32>, vector<32x128xf32>, vector<32x128xf32> -> vector<32x128xf32>
    %c0_9 = arith.constant 0 : index
    %c0_10 = arith.constant 0 : index
    %10 = vector.load %arg7[%c0_9, %c0_10] : memref<32x1xf32, #tpu.memory_space<vmem>>, vector<32x1xf32>
    %11 = vector.broadcast %10 : vector<32x1xf32> to vector<32x128xf32>
    %12 = arith.addf %9, %11 : vector<32x128xf32>
    %cst_11 = arith.constant 0.000000e+00 : f32
    %13 = vector.broadcast %cst_11 : f32 to vector<32x128xf32>
    %14 = arith.maximumf %12, %13 : vector<32x128xf32>
    %c0_12 = arith.constant 0 : index
    %c0_13 = arith.constant 0 : index
    %15 = vector.load %arg4[%c0_12, %c0_13] : memref<32x32xf32, #tpu.memory_space<vmem>>, vector<32x32xf32>
    %cst_14 = arith.constant dense<0.000000e+00> : vector<32x128xf32>
    %16 = tpu.matmul %15, %14, %cst_14 {dimension_numbers = #tpu.dot_dimension_numbers<[1], [0], [0], [1], [0, 0, 1, 1], [], []>} : vector<32x32xf32>, vector<32x128xf32>, vector<32x128xf32> -> vector<32x128xf32>
    %c0_15 = arith.constant 0 : index
    %c0_16 = arith.constant 0 : index
    %17 = vector.load %arg8[%c0_15, %c0_16] : memref<32x1xf32, #tpu.memory_space<vmem>>, vector<32x1xf32>
    %18 = vector.broadcast %17 : vector<32x1xf32> to vector<32x128xf32>
    %19 = arith.addf %16, %18 : vector<32x128xf32>
    %cst_17 = arith.constant 0.000000e+00 : f32
    %20 = vector.broadcast %cst_17 : f32 to vector<32x128xf32>
    %21 = arith.maximumf %19, %20 : vector<32x128xf32>
    %c0_18 = arith.constant 0 : index
    %c0_19 = arith.constant 0 : index
    %22 = vector.load %arg5[%c0_18, %c0_19] : memref<4x32xf32, #tpu.memory_space<vmem>>, vector<4x32xf32>
    %cst_20 = arith.constant dense<0.000000e+00> : vector<4x128xf32>
    %23 = tpu.matmul %22, %21, %cst_20 {dimension_numbers = #tpu.dot_dimension_numbers<[1], [0], [0], [1], [0, 0, 1, 1], [], []>} : vector<4x32xf32>, vector<32x128xf32>, vector<4x128xf32> -> vector<4x128xf32>
    %c0_21 = arith.constant 0 : index
    %c0_22 = arith.constant 0 : index
    %24 = vector.load %arg9[%c0_21, %c0_22] : memref<4x1xf32, #tpu.memory_space<vmem>>, vector<4x1xf32>
    %25 = vector.broadcast %24 : vector<4x1xf32> to vector<4x128xf32>
    %26 = arith.addf %23, %25 : vector<4x128xf32>
    %c0_23 = arith.constant 0 : index
    %c0_24 = arith.constant 0 : index
    %27 = vector.load %arg10[%c0_23, %c0_24] : memref<4x128xf32, #tpu.memory_space<vmem>>, vector<4x128xf32>
    tpu.vector_store %arg10[%c0_23, %c0_24], %26 {strides = array<i32>} : memref<4x128xf32, #tpu.memory_space<vmem>>, vector<4x128xf32>,
    return
  }
  func.func @transform_0(%arg0: i32) -> (i32, i32) {
    %c0_i32 = arith.constant 0 : i32
    %c0_i32_0 = arith.constant 0 : i32
    return %c0_i32, %arg0 : i32, i32
  }
  func.func @transform_1(%arg0: i32) -> (i32, i32) {
    %c0_i32 = arith.constant 0 : i32
    %c0_i32_0 = arith.constant 0 : i32
    %c0_i32_1 = arith.constant 0 : i32
    return %c0_i32, %c0_i32_0 : i32, i32
  }
  func.func @transform_2(%arg0: i32) -> (i32, i32) {
    %c0_i32 = arith.constant 0 : i32
    %c0_i32_0 = arith.constant 0 : i32
    %c0_i32_1 = arith.constant 0 : i32
    return %c0_i32, %c0_i32_0 : i32, i32
  }
  func.func @transform_3(%arg0: i32) -> (i32, i32) {
    %c0_i32 = arith.constant 0 : i32
    %c0_i32_0 = arith.constant 0 : i32
    %c0_i32_1 = arith.constant 0 : i32
    return %c0_i32, %c0_i32_0 : i32, i32
  }
  func.func @transform_4(%arg0: i32) -> (i32, i32) {
    %c0_i32 = arith.constant 0 : i32
    %c0_i32_0 = arith.constant 0 : i32
    %c0_i32_1 = arith.constant 0 : i32
    return %c0_i32, %c0_i32_0 : i32, i32
  }
  func.func @transform_5(%arg0: i32) -> (i32, i32) {
    %c0_i32 = arith.constant 0 : i32
    %c0_i32_0 = arith.constant 0 : i32
    %c0_i32_1 = arith.constant 0 : i32
    return %c0_i32, %c0_i32_0 : i32, i32
  }
  func.func @transform_6(%arg0: i32) -> (i32, i32) {
    %c0_i32 = arith.constant 0 : i32
    %c0_i32_0 = arith.constant 0 : i32
    %c0_i32_1 = arith.constant 0 : i32
    return %c0_i32, %c0_i32_0 : i32, i32
  }
  func.func @transform_7(%arg0: i32) -> (i32, i32) {
    %c0_i32 = arith.constant 0 : i32
    %c0_i32_0 = arith.constant 0 : i32
    %c0_i32_1 = arith.constant 0 : i32
    return %c0_i32, %c0_i32_0 : i32, i32
  }
  func.func @transform_8(%arg0: i32) -> (i32, i32) {
    %c0_i32 = arith.constant 0 : i32
    %c0_i32_0 = arith.constant 0 : i32
    %c0_i32_1 = arith.constant 0 : i32
    return %c0_i32, %c0_i32_0 : i32, i32
  }
  func.func @transform_9(%arg0: i32) -> (i32, i32) {
    %c0_i32 = arith.constant 0 : i32
    %c0_i32_0 = arith.constant 0 : i32
    return %c0_i32, %arg0 : i32, i32
  }
}

</mosaic_0001>

<llo_original>
// kernel: ddpm_forward.1
$region0: #{ddpm_forward.1}
  #allocation0 [shape = 'u32[]', space=smem, size = 0x4, offset = 0x4, fixed_abs, tag = 'smem constant byte address 0x4 - core index']
  #allocation1 [shape = 'u32[72,128]{1,0:T(1,128)}', space=vmem, size = 0x9000, scoped, tag = 'internal scratch']
  %s0 = inlined_call_operand.vmem [shape: f32[8,128], index: 0, kind: input, shape index: {}]
  %s1 = inlined_call_operand.vmem [shape: f32[32,8], index: 1, kind: input, shape index: {}]
  %s2 = inlined_call_operand.vmem [shape: f32[32,32], index: 2, kind: input, shape index: {}]
  %s3 = inlined_call_operand.vmem [shape: f32[32,32], index: 3, kind: input, shape index: {}]
  %s4 = inlined_call_operand.vmem [shape: f32[4,32], index: 4, kind: input, shape index: {}]
  %s5 = inlined_call_operand.vmem [shape: f32[32,1], index: 5, kind: input, shape index: {}]
  %s6 = inlined_call_operand.vmem [shape: f32[32,1], index: 6, kind: input, shape index: {}]
  %s7 = inlined_call_operand.vmem [shape: f32[32,1], index: 7, kind: input, shape index: {}]
  %s8 = inlined_call_operand.vmem [shape: f32[4,1], index: 8, kind: input, shape index: {}]
  %s9 = inlined_call_operand.vmem [shape: f32[4,128], index: 9, kind: output, shape index: {}]
  %s10 = sld [smem:[#allocation0]]
  $region46: #{ddpm_forward.1} parent=0
    _
  %s12 = ssub.s32 1, %s10
  %s13 = scalar_select 0, %s12, %s10
  // Predicated region
  $region2: #{ddpm_forward.1} parent=0 // pred_check
    _
  $region3: #{ddpm_forward.1} parent=0 // pred_check_branch
    %15 = sbr.rel (0) target = $region5
  $region4: #{ddpm_forward.1} parent=0 // pred_region
    _
  $region5: #{ddpm_forward.1} parent=0 // pred_fallthru
    _
  // Predicated region
  $region6: #{ddpm_forward.1} parent=0 // pred_check
    _
  $region7: #{ddpm_forward.1} parent=0 // pred_check_branch
    %17 = sbr.rel (0) target = $region9
  $region8: #{ddpm_forward.1} parent=0 // pred_region
    _
  $region9: #{ddpm_forward.1} parent=0 // pred_fallthru
    _
  // Predicated region
  $region10: #{ddpm_forward.1} parent=0 // pred_check
    _
  $region11: #{ddpm_forward.1} parent=0 // pred_check_branch
    %19 = sbr.rel (0) target = $region13
  $region12: #{ddpm_forward.1} parent=0 // pred_region
    _
  $region13: #{ddpm_forward.1} parent=0 // pred_fallthru
    _
  // Predicated region
  $region14: #{ddpm_forward.1} parent=0 // pred_check
    _
  $region15: #{ddpm_forward.1} parent=0 // pred_check_branch
    %21 = sbr.rel (0) target = $region17
  $region16: #{ddpm_forward.1} parent=0 // pred_region
    _
  $region17: #{ddpm_forward.1} parent=0 // pred_fallthru
    _
  // Predicated region
  $region18: #{ddpm_forward.1} parent=0 // pred_check
    _
  $region19: #{ddpm_forward.1} parent=0 // pred_check_branch
    %23 = sbr.rel (0) target = $region21
  $region20: #{ddpm_forward.1} parent=0 // pred_region
    _
  $region21: #{ddpm_forward.1} parent=0 // pred_fallthru
    _
  // Predicated region
  $region22: #{ddpm_forward.1} parent=0 // pred_check
    _
  $region23: #{ddpm_forward.1} parent=0 // pred_check_branch
    %25 = sbr.rel (0) target = $region25
  $region24: #{ddpm_forward.1} parent=0 // pred_region
    _
  $region25: #{ddpm_forward.1} parent=0 // pred_fallthru
    _
  // Predicated region
  $region26: #{ddpm_forward.1} parent=0 // pred_check
    _
  $region27: #{ddpm_forward.1} parent=0 // pred_check_branch
    %27 = sbr.rel (0) target = $region29
  $region28: #{ddpm_forward.1} parent=0 // pred_region
    _
  $region29: #{ddpm_forward.1} parent=0 // pred_fallthru
    _
  // Predicated region
  $region30: #{ddpm_forward.1} parent=0 // pred_check
    _
  $region31: #{ddpm_forward.1} parent=0 // pred_check_branch
    %29 = sbr.rel (0) target = $region33
  $region32: #{ddpm_forward.1} parent=0 // pred_region
    _
  $region33: #{ddpm_forward.1} parent=0 // pred_fallthru
    _
  // Predicated region
  $region34: #{ddpm_forward.1} parent=0 // pred_check
    _
  $region35: #{ddpm_forward.1} parent=0 // pred_check_branch
    %31 = sbr.rel (0) target = $region37
  $region36: #{ddpm_forward.1} parent=0 // pred_region
    _
  $region37: #{ddpm_forward.1} parent=0 // pred_fallthru
    _
  %v32 = vld [vmem:[%s1] sm:$0xff]
  %v33 = vld [vmem:[%s1 + $0x8] sm:$0xff]
  %v34 = vld [vmem:[%s1 + $0x10] sm:$0xff]
  %v35 = vld [vmem:[%s1 + $0x18] sm:$0xff]
  %v36 = vld [vmem:[%s0] sm:$0xff]
  %v37 = vld [vmem:[%s5] sm:$0xff]
  %v38 = vld [vmem:[%s5 + $0x8] sm:$0xff]
  %v39 = vld [vmem:[%s5 + $0x10] sm:$0xff]
  %v40 = vld [vmem:[%s5 + $0x18] sm:$0xff]
  %42 = vset.pattern.permute.xlu0 0
  %43 = vperm.xlu0 %42, %v37
  %v44 = vpop.permute.xlu0 %43
  %47 = vset.pattern.permute.xlu0 0
  %48 = vperm.xlu0 %47, %v38
  %v49 = vpop.permute.xlu0 %48
  %52 = vset.pattern.permute.xlu0 0
  %53 = vperm.xlu0 %52, %v39
  %v54 = vpop.permute.xlu0 %53
  %57 = vset.pattern.permute.xlu0 0
  %58 = vperm.xlu0 %57, %v40
  %v59 = vpop.permute.xlu0 %58
  %vm61 = vcmask 64512
  %v63 = vsel %vm61, %v32, 0
  %v66 = vsel %vm61, %v33, 0
  %v69 = vsel %vm61, %v34, 0
  %v72 = vsel %vm61, %v35, 0
  %74 = vmatpush.msra.mxu0 0.0
  %75 = vmatpush.msra.mxu0 0.0
  %76 = vmatpush.msra.mxu0 0.0
  %77 = vmatpush.msra.mxu0 0.0
  %78 = vmatpush.msra.mxu0 0.0
  %79 = vmatpush.msra.mxu0 0.0
  %80 = vmatpush.msra.mxu0 0.0
  %81 = vmatpush.msra.mxu0 0.0
  %82 = vmatpush.msra.mxu0 0.0
  %83 = vmatpush.msra.mxu0 0.0
  %84 = vmatpush.msra.mxu0 0.0
  %85 = vmatpush.msra.mxu0 0.0
  %86 = vmatpush.msra.mxu0 0.0
  %87 = vmatpush.msra.mxu0 0.0
  %88 = vmatpush.msra.mxu0 0.0
  %89 = vmatpush.msra.mxu0 %v36
  %90 = vmatmul.f32.gmra.mxu0 %v63
  %v91 = vpop.f32.mrf.mxu0
  %v92 = vadd.f32 %v44, %v91
  %93 = vmatmul.f32.gmra.mxu0 %v66
  %v94 = vpop.f32.mrf.mxu0
  %v95 = vadd.f32 %v49, %v94
  %96 = vmatmul.f32.gmra.mxu0 %v69
  %v97 = vpop.f32.mrf.mxu0
  %v98 = vadd.f32 %v54, %v97
  %99 = vmatmul.f32.gmra.mxu0 %v72
  %v100 = vpop.f32.mrf.mxu0
  %v101 = vadd.f32 %v59, %v100
  %102 = vdwg.mxu0
  %v103 = vmax.f32 %v92, 0.0
  %v104 = vmax.f32 %v95, 0.0
  %v105 = vmax.f32 %v98, 0.0
  %v106 = vmax.f32 %v101, 0.0
  %v107 = vld [vmem:[%s2] sm:$0xff]
  %v108 = vld [vmem:[%s2 + $0x8] sm:$0xff]
  %v109 = vld [vmem:[%s2 + $0x10] sm:$0xff]
  %v110 = vld [vmem:[%s2 + $0x18] sm:$0xff]
  %v111 = vld [vmem:[%s6] sm:$0xff]
  %v112 = vld [vmem:[%s6 + $0x8] sm:$0xff]
  %v113 = vld [vmem:[%s6 + $0x10] sm:$0xff]
  %v114 = vld [vmem:[%s6 + $0x18] sm:$0xff]
  %116 = vset.pattern.permute.xlu0 0
  %117 = vperm.xlu0 %116, %v111
  %v118 = vpop.permute.xlu0 %117
  %121 = vset.pattern.permute.xlu0 0
  %122 = vperm.xlu0 %121, %v112
  %v123 = vpop.permute.xlu0 %122
  %126 = vset.pattern.permute.xlu0 0
  %127 = vperm.xlu0 %126, %v113
  %v128 = vpop.permute.xlu0 %127
  %131 = vset.pattern.permute.xlu0 0
  %132 = vperm.xlu0 %131, %v114
  %v133 = vpop.permute.xlu0 %132
  %vm135 = vcmask 261120
  %v137 = vsel %vm135, %v107, 0
  %v140 = vsel %vm135, %v108, 0
  %v143 = vsel %vm135, %v109, 0
  %v146 = vsel %vm135, %v110, 0
  %148 = vmatpush.msra.mxu0 0.0
  %149 = vmatpush.msra.mxu0 0.0
  %150 = vmatpush.msra.mxu0 0.0
  %151 = vmatpush.msra.mxu0 0.0
  %152 = vmatpush.msra.mxu0 0.0
  %153 = vmatpush.msra.mxu0 0.0
  %154 = vmatpush.msra.mxu0 0.0
  %155 = vmatpush.msra.mxu0 0.0
  %156 = vmatpush.msra.mxu0 0.0
  %157 = vmatpush.msra.mxu0 0.0
  %158 = vmatpush.msra.mxu0 0.0
  %159 = vmatpush.msra.mxu0 0.0
  %160 = vmatpush.msra.mxu0 %v106
  %161 = vmatpush.msra.mxu0 %v105
  %162 = vmatpush.msra.mxu0 %v104
  %163 = vmatpush.msra.mxu0 %v103
  %164 = vmatmul.f32.gmra.mxu0 %v137
  %v165 = vpop.f32.mrf.mxu0
  %v166 = vadd.f32 %v118, %v165
  %167 = vmatmul.f32.gmra.mxu0 %v140
  %v168 = vpop.f32.mrf.mxu0
  %v169 = vadd.f32 %v123, %v168
  %170 = vmatmul.f32.gmra.mxu0 %v143
  %v171 = vpop.f32.mrf.mxu0
  %v172 = vadd.f32 %v128, %v171
  %173 = vmatmul.f32.gmra.mxu0 %v146
  %v174 = vpop.f32.mrf.mxu0
  %v175 = vadd.f32 %v133, %v174
  %176 = vdwg.mxu0
  %v177 = vmax.f32 %v166, 0.0
  %v178 = vmax.f32 %v169, 0.0
  %v179 = vmax.f32 %v172, 0.0
  %v180 = vmax.f32 %v175, 0.0
  %v181 = vld [vmem:[%s3] sm:$0xff]
  %v182 = vld [vmem:[%s3 + $0x8] sm:$0xff]
  %v183 = vld [vmem:[%s3 + $0x10] sm:$0xff]
  %v184 = vld [vmem:[%s3 + $0x18] sm:$0xff]
  %v185 = vld [vmem:[%s7] sm:$0xff]
  %v186 = vld [vmem:[%s7 + $0x8] sm:$0xff]
  %v187 = vld [vmem:[%s7 + $0x10] sm:$0xff]
  %v188 = vld [vmem:[%s7 + $0x18] sm:$0xff]
  %190 = vset.pattern.permute.xlu0 0
  %191 = vperm.xlu0 %190, %v185
  %v192 = vpop.permute.xlu0 %191
  %195 = vset.pattern.permute.xlu0 0
  %196 = vperm.xlu0 %195, %v186
  %v197 = vpop.permute.xlu0 %196
  %200 = vset.pattern.permute.xlu0 0
  %201 = vperm.xlu0 %200, %v187
  %v202 = vpop.permute.xlu0 %201
  %205 = vset.pattern.permute.xlu0 0
  %206 = vperm.xlu0 %205, %v188
  %v207 = vpop.permute.xlu0 %206
  %v210 = vsel %vm135, %v181, 0
  %v213 = vsel %vm135, %v182, 0
  %v216 = vsel %vm135, %v183, 0
  %v219 = vsel %vm135, %v184, 0
  %221 = vmatpush.msra.mxu0 0.0
  %222 = vmatpush.msra.mxu0 0.0
  %223 = vmatpush.msra.mxu0 0.0
  %224 = vmatpush.msra.mxu0 0.0
  %225 = vmatpush.msra.mxu0 0.0
  %226 = vmatpush.msra.mxu0 0.0
  %227 = vmatpush.msra.mxu0 0.0
  %228 = vmatpush.msra.mxu0 0.0
  %229 = vmatpush.msra.mxu0 0.0
  %230 = vmatpush.msra.mxu0 0.0
  %231 = vmatpush.msra.mxu0 0.0
  %232 = vmatpush.msra.mxu0 0.0
  %233 = vmatpush.msra.mxu0 %v180
  %234 = vmatpush.msra.mxu0 %v179
  %235 = vmatpush.msra.mxu0 %v178
  %236 = vmatpush.msra.mxu0 %v177
  %237 = vmatmul.f32.gmra.mxu0 %v210
  %v238 = vpop.f32.mrf.mxu0
  %v239 = vadd.f32 %v192, %v238
  %240 = vmatmul.f32.gmra.mxu0 %v213
  %v241 = vpop.f32.mrf.mxu0
  %v242 = vadd.f32 %v197, %v241
  %243 = vmatmul.f32.gmra.mxu0 %v216
  %v244 = vpop.f32.mrf.mxu0
  %v245 = vadd.f32 %v202, %v244
  %246 = vmatmul.f32.gmra.mxu0 %v219
  %v247 = vpop.f32.mrf.mxu0
  %v248 = vadd.f32 %v207, %v247
  %249 = vdwg.mxu0
  %v250 = vmax.f32 %v239, 0.0
  %v251 = vmax.f32 %v242, 0.0
  %v252 = vmax.f32 %v245, 0.0
  %v253 = vmax.f32 %v248, 0.0
  %v254 = vld [vmem:[%s4] sm:$0xf]
  %v255 = vld [vmem:[%s8] sm:$0xf]
  %257 = vset.pattern.permute.xlu0 0
  %258 = vperm.xlu0 %257, %v255
  %v259 = vpop.permute.xlu0 %258
  %v262 = vsel %vm135, %v254, 0
  %264 = vmatpush.msra.mxu0 0.0
  %265 = vmatpush.msra.mxu0 0.0
  %266 = vmatpush.msra.mxu0 0.0
  %267 = vmatpush.msra.mxu0 0.0
  %268 = vmatpush.msra.mxu0 0.0
  %269 = vmatpush.msra.mxu0 0.0
  %270 = vmatpush.msra.mxu0 0.0
  %271 = vmatpush.msra.mxu0 0.0
  %272 = vmatpush.msra.mxu0 0.0
  %273 = vmatpush.msra.mxu0 0.0
  %274 = vmatpush.msra.mxu0 0.0
  %275 = vmatpush.msra.mxu0 0.0
  %276 = vmatpush.msra.mxu0 %v253
  %277 = vmatpush.msra.mxu0 %v252
  %278 = vmatpush.msra.mxu0 %v251
  %279 = vmatpush.msra.mxu0 %v250
  %280 = vmatmul.f32.gmra.mxu0 %v262
  %v281 = vpop.f32.mrf.mxu0
  %v282 = vadd.f32 %v259, %v281
  %283 = vdwg.mxu0
  %284 = vst [vmem:[%s9] sm:$0xf] %v282
  // Predicated region
  $region38: #{ddpm_forward.1} parent=0 // pred_check
    _
  $region39: #{ddpm_forward.1} parent=0 // pred_check_branch
    %286 = sbr.rel (0) target = $region41
  $region40: #{ddpm_forward.1} parent=0 // pred_region
    _
  $region41: #{ddpm_forward.1} parent=0 // pred_fallthru
    _
  // Predicated region
  $region42: #{ddpm_forward.1} parent=0 // pred_check
    _
  $region43: #{ddpm_forward.1} parent=0 // pred_check_branch
    %288 = sbr.rel (0) target = $region45
  $region44: #{ddpm_forward.1} parent=0 // pred_region
    _
  $region45: #{ddpm_forward.1} parent=0 // pred_fallthru
    _

</llo_original>
